<compile_context>
chip_gen: v7x
topology: tpu7x:2x2x1
jax: 0.10.0
libtpu: 0.0.40
codegen_flags: <defaults>
</compile_context>

<pallas_src>
import jax
import jax.numpy as jnp
from jax.experimental import pallas as pl
from jax.experimental.pallas import tpu as pltpu

# Small demo shapes consistent with the module's forward (Conv1d => NCL input).
N = 2        # batch
C_IN = 4     # input channels
C_OUT = 8    # output channels
L = 16       # sequence length
K = 3        # depthwise kernel size
STRIDE = 1
PAD = 1
EPS = 1e-5

L1 = (L + 2 * PAD - K) // STRIDE + 1   # length after first depthwise conv
L2 = (L1 + 2 * PAD - K) // 1 + 1       # length after second depthwise conv
LP0 = L + 2 * PAD                      # padded input length
LP1 = L1 + 2 * PAD                     # padded intermediate length
NC_IN = N * C_IN                       # folded row count (fills the 8-sublane vreg)
NC_OUT = N * C_OUT


def _depthwise(x_pad, w_rows, stride, lo):
    """Depthwise 1-D conv on the folded (N*C, Lp) tile via K unrolled VPU mul-adds.

    x_pad: (N*C, Lp) zero-padded along lanes; w_rows: (N*C, K) per-row taps."""
    rows = x_pad.shape[0]
    acc = jnp.zeros((rows, lo), jnp.float32)
    for kk in range(K):                                     # K static taps
        if stride == 1:
            tap = jax.lax.slice_in_dim(x_pad, kk, kk + lo, axis=1)
        else:
            # TODO(synk): strided lane slices can lower to gathers; for stride>1 handle
            # the stride at the DMA/index_map level instead.
            tap = jax.lax.slice(x_pad, (0, kk),
                                (rows, kk + (lo - 1) * stride + 1), (1, stride))
        acc = acc + tap * w_rows[:, kk:kk + 1]              # (N*C,1) lane broadcast
    return acc


def _pointwise_block(yb, w, c_out):
    """1x1 conv on one batch block: yb (C_in, L) -> (c_out, L) via C_in VPU mul-adds.

    w: (C_in, c_out, 1).  MXU deliberately unused at these channel counts."""
    c_in, l = yb.shape
    acc = jnp.zeros((c_out, l), jnp.float32)
    for ci in range(c_in):
        acc = acc + yb[ci:ci + 1, :] * w[ci]                # (1,L) x (c_out,1) broadcast
    return acc


def sepconv_kernel(x_ref, wdw1_ref, wpw1_ref, g1_ref, b1_ref,
                   wdw2_ref, wpw2_ref, g2_ref, b2_ref, o_ref,
                   xpad_ref, ypad_ref):
    # ---- stage 1: ReLU + zero-pad along L.  Only the 2*PAD halo lanes are zeroed
    # (no full-tile zero-then-overwrite); relu(0)==0 so ReLU-before-pad is equivalent.
    xpad_ref[:, :PAD] = jnp.zeros((NC_IN, PAD), jnp.float32)
    xpad_ref[:, PAD + L:] = jnp.zeros((NC_IN, PAD), jnp.float32)
    xpad_ref[:, PAD:PAD + L] = jnp.maximum(x_ref[...], 0.0)

    # ---- depthwise conv #1 on the fully packed (N*C_IN, L) tile
    y1 = _depthwise(xpad_ref[...], wdw1_ref[...], STRIDE, L1)      # (N*C_IN, L1)

    # ---- pointwise conv #1 + BN1 stats (single-pass sum / sum-of-squares, f32)
    wpw1 = wpw1_ref[...]
    blocks1 = []
    s1 = jnp.zeros((C_IN, 1), jnp.float32)
    q1 = jnp.zeros((C_IN, 1), jnp.float32)
    for ni in range(N):                                     # N is tiny & static
        blk = _pointwise_block(y1[ni * C_IN:(ni + 1) * C_IN, :], wpw1, C_IN)
        s1 = s1 + jnp.sum(blk, axis=1, keepdims=True)
        q1 = q1 + jnp.sum(blk * blk, axis=1, keepdims=True)
        blocks1.append(blk)

    inv_cnt1 = 1.0 / float(N * L1)
    mean1 = s1 * inv_cnt1
    var1 = q1 * inv_cnt1 - mean1 * mean1                    # biased (training-mode) var
    scale1 = jax.lax.rsqrt(var1 + EPS) * g1_ref[...]        # (C_IN, 1)
    shift1 = b1_ref[...] - mean1 * scale1

    # ---- BN1 apply + ReLU fused into the padded-tile stores for depthwise conv #2
    ypad_ref[:, :PAD] = jnp.zeros((NC_IN, PAD), jnp.float32)
    ypad_ref[:, PAD + L1:] = jnp.zeros((NC_IN, PAD), jnp.float32)
    for ni in range(N):
        ypad_ref[ni * C_IN:(ni + 1) * C_IN, PAD:PAD + L1] = jnp.maximum(
            blocks1[ni] * scale1 + shift1, 0.0)

    # ---- depthwise conv #2 (stride 1) on the packed tile
    y2 = _depthwise(ypad_ref[...], wdw2_ref[...], 1, L2)            # (N*C_IN, L2)

    # ---- pointwise conv #2 (C_IN -> C_OUT) + BN2 stats
    wpw2 = wpw2_ref[...]
    blocks2 = []
    s2 = jnp.zeros((C_OUT, 1), jnp.float32)
    q2 = jnp.zeros((C_OUT, 1), jnp.float32)
    for ni in range(N):
        blk = _pointwise_block(y2[ni * C_IN:(ni + 1) * C_IN, :], wpw2, C_OUT)
        s2 = s2 + jnp.sum(blk, axis=1, keepdims=True)
        q2 = q2 + jnp.sum(blk * blk, axis=1, keepdims=True)
        blocks2.append(blk)

    inv_cnt2 = 1.0 / float(N * L2)
    mean2 = s2 * inv_cnt2
    var2 = q2 * inv_cnt2 - mean2 * mean2
    scale2 = jax.lax.rsqrt(var2 + EPS) * g2_ref[...]        # (C_OUT, 1)
    shift2 = b2_ref[...] - mean2 * scale2

    # ---- BN2 apply fused into the output stores (rows n*C_OUT + c)
    for ni in range(N):
        o_ref[ni * C_OUT:(ni + 1) * C_OUT, :] = blocks2[ni] * scale2 + shift2


@jax.jit
def sepconv_pallas(x_ncl, wdw1_rows, wpw1, g1, b1, wdw2_rows, wpw2, g2, b2):
    """x_ncl: (N, C_in, L) exactly like PyTorch Conv1d input. Returns (N, C_out, L2)."""
    # Contiguous fold (row = n*C_IN + c): pure metadata reshape, no HBM round trip.
    x2d = x_ncl.reshape(NC_IN, L)
    vmem = pl.BlockSpec(memory_space=pltpu.MemorySpace.VMEM)

    flops = (2 * K * NC_IN * L1 + 2 * C_IN * C_IN * N * L1
             + 2 * K * NC_IN * L2 + 2 * C_IN * C_OUT * N * L2
             + 10 * (NC_IN * L1 + NC_OUT * L2))
    bytes_accessed = 4 * (NC_IN * L + NC_OUT * L2 + 2 * NC_IN * K
                          + C_IN * C_IN + C_IN * C_OUT + 2 * (C_IN + C_OUT))

    out2d = pl.pallas_call(
        sepconv_kernel,
        out_shape=jax.ShapeDtypeStruct((NC_OUT, L2), jnp.float32),
        in_specs=[vmem] * 9,
        out_specs=vmem,
        scratch_shapes=[pltpu.VMEM((NC_IN, LP0), jnp.float32),
                        pltpu.VMEM((NC_IN, LP1), jnp.float32)],
        compiler_params=pltpu.CompilerParams(vmem_limit_bytes=32 * 1024 * 1024),
        cost_estimate=pl.CostEstimate(flops=int(flops),
                                      transcendentals=C_IN + C_OUT,
                                      bytes_accessed=int(bytes_accessed)),
    )(x2d, wdw1_rows, wpw1, g1, b1, wdw2_rows, wpw2, g2, b2)
    return out2d.reshape(N, C_OUT, L2)      # contiguous un-fold, pure metadata


# ---------------- pure-JAX reference (PyTorch NCL semantics) ----------------
def _conv1d_ref(x, w, stride, pad, groups):
    return jax.lax.conv_general_dilated(
        x, w, window_strides=(stride,), padding=[(pad, pad)],
        dimension_numbers=("NCH", "OIH", "NCH"),
        feature_group_count=groups)


def _bn_ref(x, gamma, beta):
    mean = jnp.mean(x, axis=(0, 2), keepdims=True)
    var = jnp.mean((x - mean) ** 2, axis=(0, 2), keepdims=True)
    return (x - mean) * jax.lax.rsqrt(var + EPS) * gamma[None, :, None] + beta[None, :, None]


def sepconv_reference(x, p):
    y = jnp.maximum(x, 0.0)
    y = _conv1d_ref(y, p["wdw1_oih"], STRIDE, PAD, C_IN)
    y = _conv1d_ref(y, p["wpw1_oih"], 1, 0, 1)
    y = _bn_ref(y, p["g1"], p["b1"])
    y = jnp.maximum(y, 0.0)
    y = _conv1d_ref(y, p["wdw2_oih"], 1, PAD, C_IN)
    y = _conv1d_ref(y, p["wpw2_oih"], 1, 0, 1)
    y = _bn_ref(y, p["g2"], p["b2"])
    return y


if __name__ == "__main__":
    key = jax.random.PRNGKey(0)
    ks = jax.random.split(key, 9)
    x = jax.random.normal(ks[0], (N, C_IN, L), jnp.float32)

    # Deterministic synthetic parameters in PyTorch shapes.
    wdw1_oih = 0.3 * jax.random.normal(ks[1], (C_IN, 1, K), jnp.float32)     # depthwise 1
    wpw1_oih = 0.3 * jax.random.normal(ks[2], (C_IN, C_IN, 1), jnp.float32)  # pointwise 1
    wdw2_oih = 0.3 * jax.random.normal(ks[3], (C_IN, 1, K), jnp.float32)     # depthwise 2
    wpw2_oih = 0.3 * jax.random.normal(ks[4], (C_OUT, C_IN, 1), jnp.float32) # pointwise 2
    g1 = 1.0 + 0.1 * jax.random.normal(ks[5], (C_IN,), jnp.float32)
    b1 = 0.1 * jax.random.normal(ks[6], (C_IN,), jnp.float32)
    g2 = 1.0 + 0.1 * jax.random.normal(ks[7], (C_OUT,), jnp.float32)
    b2 = 0.1 * jax.random.normal(ks[8], (C_OUT,), jnp.float32)

    # One-time parameter repack (glue) into kernel-friendly layouts:
    #   depthwise weights tiled to per-row (N*C_IN, K) for the folded tile;
    #   pointwise weights as (C_in, C_out, 1); BN params as (C, 1) columns.
    wdw1_rows = jnp.tile(wdw1_oih[:, 0, :], (N, 1))                      # (N*C_IN, K)
    wdw2_rows = jnp.tile(wdw2_oih[:, 0, :], (N, 1))
    wpw1_k = jnp.transpose(wpw1_oih[:, :, 0], (1, 0))[:, :, None]        # (C_in, C_out, 1)
    wpw2_k = jnp.transpose(wpw2_oih[:, :, 0], (1, 0))[:, :, None]
    g1_k, b1_k = g1[:, None], b1[:, None]
    g2_k, b2_k = g2[:, None], b2[:, None]

    out = sepconv_pallas(x, wdw1_rows, wpw1_k, g1_k, b1_k,
                         wdw2_rows, wpw2_k, g2_k, b2_k)
    out = jax.block_until_ready(out)

    ref = sepconv_reference(x, dict(
        wdw1_oih=wdw1_oih, wpw1_oih=wpw1_oih, wdw2_oih=wdw2_oih,
        wpw2_oih=wpw2_oih, g1=g1, b1=b1, g2=g2, b2=b2))

    assert out.shape == (N, C_OUT, L2), out.shape
    err = float(jnp.max(jnp.abs(out - ref)))
    assert jnp.allclose(out, ref, atol=1e-4, rtol=1e-4), f"max abs err={err}"
    print("KERNEL_OK")
</pallas_src>

<mosaic_0001>
module attributes {stable_mosaic.version = 11 : i64} {
  func.func @sepconv_kernel(%arg0: memref<8x16xf32, #tpu.memory_space<vmem>>, %arg1: memref<8x3xf32, #tpu.memory_space<vmem>>, %arg2: memref<4x4x1xf32, #tpu.memory_space<vmem>>, %arg3: memref<4x1xf32, #tpu.memory_space<vmem>>, %arg4: memref<4x1xf32, #tpu.memory_space<vmem>>, %arg5: memref<8x3xf32, #tpu.memory_space<vmem>>, %arg6: memref<4x8x1xf32, #tpu.memory_space<vmem>>, %arg7: memref<8x1xf32, #tpu.memory_space<vmem>>, %arg8: memref<8x1xf32, #tpu.memory_space<vmem>>, %arg9: memref<16x16xf32, #tpu.memory_space<vmem>>, %arg10: memref<8x18xf32, #tpu.memory_space<vmem>>, %arg11: memref<8x18xf32, #tpu.memory_space<vmem>>) attributes {dimension_semantics = [], scalar_prefetch = 0 : i64, scratch_operands = 2 : i64, tpu.core_type = #tpu.core_type<tc>} {
    %cst = arith.constant 0.000000e+00 : f32
    %0 = vector.broadcast %cst : f32 to vector<8x1xf32>
    %c0 = arith.constant 0 : index
    %c0_0 = arith.constant 0 : index
    %1 = vector.load %arg10[%c0, %c0_0] : memref<8x18xf32, #tpu.memory_space<vmem>>, vector<8x1xf32>
    tpu.vector_store %arg10[%c0, %c0_0], %0 {strides = array<i32>} : memref<8x18xf32, #tpu.memory_space<vmem>>, vector<8x1xf32>,
    %cst_1 = arith.constant 0.000000e+00 : f32
    %2 = vector.broadcast %cst_1 : f32 to vector<8x1xf32>
    %c0_2 = arith.constant 0 : index
    %c17 = arith.constant 17 : index
    %3 = vector.load %arg10[%c0_2, %c17] : memref<8x18xf32, #tpu.memory_space<vmem>>, vector<8x1xf32>
    tpu.vector_store %arg10[%c0_2, %c17], %2 {strides = array<i32>} : memref<8x18xf32, #tpu.memory_space<vmem>>, vector<8x1xf32>,
    %c0_3 = arith.constant 0 : index
    %c0_4 = arith.constant 0 : index
    %4 = vector.load %arg0[%c0_3, %c0_4] : memref<8x16xf32, #tpu.memory_space<vmem>>, vector<8x16xf32>
    %cst_5 = arith.constant 0.000000e+00 : f32
    %5 = vector.broadcast %cst_5 : f32 to vector<8x16xf32>
    %6 = arith.maximumf %4, %5 : vector<8x16xf32>
    %c0_6 = arith.constant 0 : index
    %c1 = arith.constant 1 : index
    %7 = vector.load %arg10[%c0_6, %c1] : memref<8x18xf32, #tpu.memory_space<vmem>>, vector<8x16xf32>
    tpu.vector_store %arg10[%c0_6, %c1], %6 {strides = array<i32>} : memref<8x18xf32, #tpu.memory_space<vmem>>, vector<8x16xf32>,
    %c0_7 = arith.constant 0 : index
    %c0_8 = arith.constant 0 : index
    %8 = vector.load %arg10[%c0_7, %c0_8] : memref<8x18xf32, #tpu.memory_space<vmem>>, vector<8x18xf32>
    %c0_9 = arith.constant 0 : index
    %c0_10 = arith.constant 0 : index
    %9 = vector.load %arg1[%c0_9, %c0_10] : memref<8x3xf32, #tpu.memory_space<vmem>>, vector<8x3xf32>
    %cst_11 = arith.constant 0.000000e+00 : f32
    %10 = vector.broadcast %cst_11 : f32 to vector<8x16xf32>
    %11 = vector.extract_strided_slice %8 {offsets = [0, 0], sizes = [8, 16], strides = [1, 1]} : vector<8x18xf32> to vector<8x16xf32>
    %12 = vector.extract_strided_slice %9 {offsets = [0, 0], sizes = [8, 1], strides = [1, 1]} : vector<8x3xf32> to vector<8x1xf32>
    %13 = vector.broadcast %12 : vector<8x1xf32> to vector<8x16xf32>
    %14 = arith.mulf %11, %13 : vector<8x16xf32>
    %15 = arith.addf %10, %14 : vector<8x16xf32>
    %16 = vector.extract_strided_slice %8 {offsets = [0, 1], sizes = [8, 16], strides = [1, 1]} : vector<8x18xf32> to vector<8x16xf32>
    %17 = vector.extract_strided_slice %9 {offsets = [0, 1], sizes = [8, 1], strides = [1, 1]} : vector<8x3xf32> to vector<8x1xf32>
    %18 = vector.broadcast %17 : vector<8x1xf32> to vector<8x16xf32>
    %19 = arith.mulf %16, %18 : vector<8x16xf32>
    %20 = arith.addf %15, %19 : vector<8x16xf32>
    %21 = vector.extract_strided_slice %8 {offsets = [0, 2], sizes = [8, 16], strides = [1, 1]} : vector<8x18xf32> to vector<8x16xf32>
    %22 = vector.extract_strided_slice %9 {offsets = [0, 2], sizes = [8, 1], strides = [1, 1]} : vector<8x3xf32> to vector<8x1xf32>
    %23 = vector.broadcast %22 : vector<8x1xf32> to vector<8x16xf32>
    %24 = arith.mulf %21, %23 : vector<8x16xf32>
    %25 = arith.addf %20, %24 : vector<8x16xf32>
    %c0_12 = arith.constant 0 : index
    %c0_13 = arith.constant 0 : index
    %c0_14 = arith.constant 0 : index
    %26 = vector.load %arg2[%c0_12, %c0_13, %c0_14] : memref<4x4x1xf32, #tpu.memory_space<vmem>>, vector<4x4x1xf32>
    %cst_15 = arith.constant 0.000000e+00 : f32
    %27 = vector.broadcast %cst_15 : f32 to vector<4x1xf32>
    %cst_16 = arith.constant 0.000000e+00 : f32
    %28 = vector.broadcast %cst_16 : f32 to vector<4x1xf32>
    %29 = vector.extract_strided_slice %25 {offsets = [0, 0], sizes = [4, 16], strides = [1, 1]} : vector<8x16xf32> to vector<4x16xf32>
    %cst_17 = arith.constant 0.000000e+00 : f32
    %30 = vector.broadcast %cst_17 : f32 to vector<4x16xf32>
    %31 = vector.extract_strided_slice %29 {offsets = [0, 0], sizes = [1, 16], strides = [1, 1]} : vector<4x16xf32> to vector<1x16xf32>
    %32 = vector.extract_strided_slice %26 {offsets = [0, 0, 0], sizes = [1, 4, 1], strides = [1, 1, 1]} : vector<4x4x1xf32> to vector<1x4x1xf32>
    %33 = vector.shape_cast %32 : vector<1x4x1xf32> to vector<4x1xf32>
    %34 = vector.broadcast %31 : vector<1x16xf32> to vector<4x16xf32>
    %35 = vector.broadcast %33 : vector<4x1xf32> to vector<4x16xf32>
    %36 = arith.mulf %34, %35 : vector<4x16xf32>
    %37 = arith.addf %30, %36 : vector<4x16xf32>
    %38 = vector.extract_strided_slice %29 {offsets = [1, 0], sizes = [1, 16], strides = [1, 1]} : vector<4x16xf32> to vector<1x16xf32>
    %39 = vector.extract_strided_slice %26 {offsets = [1, 0, 0], sizes = [1, 4, 1], strides = [1, 1, 1]} : vector<4x4x1xf32> to vector<1x4x1xf32>
    %40 = vector.shape_cast %39 : vector<1x4x1xf32> to vector<4x1xf32>
    %41 = vector.broadcast %38 : vector<1x16xf32> to vector<4x16xf32>
    %42 = vector.broadcast %40 : vector<4x1xf32> to vector<4x16xf32>
    %43 = arith.mulf %41, %42 : vector<4x16xf32>
    %44 = arith.addf %37, %43 : vector<4x16xf32>
    %45 = vector.extract_strided_slice %29 {offsets = [2, 0], sizes = [1, 16], strides = [1, 1]} : vector<4x16xf32> to vector<1x16xf32>
    %46 = vector.extract_strided_slice %26 {offsets = [2, 0, 0], sizes = [1, 4, 1], strides = [1, 1, 1]} : vector<4x4x1xf32> to vector<1x4x1xf32>
    %47 = vector.shape_cast %46 : vector<1x4x1xf32> to vector<4x1xf32>
    %48 = vector.broadcast %45 : vector<1x16xf32> to vector<4x16xf32>
    %49 = vector.broadcast %47 : vector<4x1xf32> to vector<4x16xf32>
    %50 = arith.mulf %48, %49 : vector<4x16xf32>
    %51 = arith.addf %44, %50 : vector<4x16xf32>
    %52 = vector.extract_strided_slice %29 {offsets = [3, 0], sizes = [1, 16], strides = [1, 1]} : vector<4x16xf32> to vector<1x16xf32>
    %53 = vector.extract_strided_slice %26 {offsets = [3, 0, 0], sizes = [1, 4, 1], strides = [1, 1, 1]} : vector<4x4x1xf32> to vector<1x4x1xf32>
    %54 = vector.shape_cast %53 : vector<1x4x1xf32> to vector<4x1xf32>
    %55 = vector.broadcast %52 : vector<1x16xf32> to vector<4x16xf32>
    %56 = vector.broadcast %54 : vector<4x1xf32> to vector<4x16xf32>
    %57 = arith.mulf %55, %56 : vector<4x16xf32>
    %58 = arith.addf %51, %57 : vector<4x16xf32>
    %cst_18 = arith.constant dense<0.000000e+00> : vector<4xf32>
    %59 = vector.multi_reduction <add>, %58, %cst_18 [1] : vector<4x16xf32> to vector<4xf32>
    %60 = vector.shape_cast %59 : vector<4xf32> to vector<4x1xf32>
    %61 = arith.addf %27, %60 : vector<4x1xf32>
    %62 = arith.mulf %58, %58 : vector<4x16xf32>
    %cst_19 = arith.constant dense<0.000000e+00> : vector<4xf32>
    %63 = vector.multi_reduction <add>, %62, %cst_19 [1] : vector<4x16xf32> to vector<4xf32>
    %64 = vector.shape_cast %63 : vector<4xf32> to vector<4x1xf32>
    %65 = arith.addf %28, %64 : vector<4x1xf32>
    %66 = vector.extract_strided_slice %25 {offsets = [4, 0], sizes = [4, 16], strides = [1, 1]} : vector<8x16xf32> to vector<4x16xf32>
    %cst_20 = arith.constant 0.000000e+00 : f32
    %67 = vector.broadcast %cst_20 : f32 to vector<4x16xf32>
    %68 = vector.extract_strided_slice %66 {offsets = [0, 0], sizes = [1, 16], strides = [1, 1]} : vector<4x16xf32> to vector<1x16xf32>
    %69 = vector.extract_strided_slice %26 {offsets = [0, 0, 0], sizes = [1, 4, 1], strides = [1, 1, 1]} : vector<4x4x1xf32> to vector<1x4x1xf32>
    %70 = vector.shape_cast %69 : vector<1x4x1xf32> to vector<4x1xf32>
    %71 = vector.broadcast %68 : vector<1x16xf32> to vector<4x16xf32>
    %72 = vector.broadcast %70 : vector<4x1xf32> to vector<4x16xf32>
    %73 = arith.mulf %71, %72 : vector<4x16xf32>
    %74 = arith.addf %67, %73 : vector<4x16xf32>
    %75 = vector.extract_strided_slice %66 {offsets = [1, 0], sizes = [1, 16], strides = [1, 1]} : vector<4x16xf32> to vector<1x16xf32>
    %76 = vector.extract_strided_slice %26 {offsets = [1, 0, 0], sizes = [1, 4, 1], strides = [1, 1, 1]} : vector<4x4x1xf32> to vector<1x4x1xf32>
    %77 = vector.shape_cast %76 : vector<1x4x1xf32> to vector<4x1xf32>
    %78 = vector.broadcast %75 : vector<1x16xf32> to vector<4x16xf32>
    %79 = vector.broadcast %77 : vector<4x1xf32> to vector<4x16xf32>
    %80 = arith.mulf %78, %79 : vector<4x16xf32>
    %81 = arith.addf %74, %80 : vector<4x16xf32>
    %82 = vector.extract_strided_slice %66 {offsets = [2, 0], sizes = [1, 16], strides = [1, 1]} : vector<4x16xf32> to vector<1x16xf32>
    %83 = vector.extract_strided_slice %26 {offsets = [2, 0, 0], sizes = [1, 4, 1], strides = [1, 1, 1]} : vector<4x4x1xf32> to vector<1x4x1xf32>
    %84 = vector.shape_cast %83 : vector<1x4x1xf32> to vector<4x1xf32>
    %85 = vector.broadcast %82 : vector<1x16xf32> to vector<4x16xf32>
    %86 = vector.broadcast %84 : vector<4x1xf32> to vector<4x16xf32>
    %87 = arith.mulf %85, %86 : vector<4x16xf32>
    %88 = arith.addf %81, %87 : vector<4x16xf32>
    %89 = vector.extract_strided_slice %66 {offsets = [3, 0], sizes = [1, 16], strides = [1, 1]} : vector<4x16xf32> to vector<1x16xf32>
    %90 = vector.extract_strided_slice %26 {offsets = [3, 0, 0], sizes = [1, 4, 1], strides = [1, 1, 1]} : vector<4x4x1xf32> to vector<1x4x1xf32>
    %91 = vector.shape_cast %90 : vector<1x4x1xf32> to vector<4x1xf32>
    %92 = vector.broadcast %89 : vector<1x16xf32> to vector<4x16xf32>
    %93 = vector.broadcast %91 : vector<4x1xf32> to vector<4x16xf32>
    %94 = arith.mulf %92, %93 : vector<4x16xf32>
    %95 = arith.addf %88, %94 : vector<4x16xf32>
    %cst_21 = arith.constant dense<0.000000e+00> : vector<4xf32>
    %96 = vector.multi_reduction <add>, %95, %cst_21 [1] : vector<4x16xf32> to vector<4xf32>
    %97 = vector.shape_cast %96 : vector<4xf32> to vector<4x1xf32>
    %98 = arith.addf %61, %97 : vector<4x1xf32>
    %99 = arith.mulf %95, %95 : vector<4x16xf32>
    %cst_22 = arith.constant dense<0.000000e+00> : vector<4xf32>
    %100 = vector.multi_reduction <add>, %99, %cst_22 [1] : vector<4x16xf32> to vector<4xf32>
    %101 = vector.shape_cast %100 : vector<4xf32> to vector<4x1xf32>
    %102 = arith.addf %65, %101 : vector<4x1xf32>
    %cst_23 = arith.constant 3.125000e-02 : f32
    %103 = vector.broadcast %cst_23 : f32 to vector<4x1xf32>
    %104 = arith.mulf %98, %103 : vector<4x1xf32>
    %cst_24 = arith.constant 3.125000e-02 : f32
    %105 = vector.broadcast %cst_24 : f32 to vector<4x1xf32>
    %106 = arith.mulf %102, %105 : vector<4x1xf32>
    %107 = arith.mulf %104, %104 : vector<4x1xf32>
    %108 = arith.subf %106, %107 : vector<4x1xf32>
    %cst_25 = arith.constant 9.99999974E-6 : f32
    %109 = vector.broadcast %cst_25 : f32 to vector<4x1xf32>
    %110 = arith.addf %108, %109 : vector<4x1xf32>
    %111 = math.rsqrt %110 : vector<4x1xf32>
    %c0_26 = arith.constant 0 : index
    %c0_27 = arith.constant 0 : index
    %112 = vector.load %arg3[%c0_26, %c0_27] : memref<4x1xf32, #tpu.memory_space<vmem>>, vector<4x1xf32>
    %113 = arith.mulf %111, %112 : vector<4x1xf32>
    %c0_28 = arith.constant 0 : index
    %c0_29 = arith.constant 0 : index
    %114 = vector.load %arg4[%c0_28, %c0_29] : memref<4x1xf32, #tpu.memory_space<vmem>>, vector<4x1xf32>
    %115 = arith.mulf %104, %113 : vector<4x1xf32>
    %116 = arith.subf %114, %115 : vector<4x1xf32>
    %cst_30 = arith.constant 0.000000e+00 : f32
    %117 = vector.broadcast %cst_30 : f32 to vector<8x1xf32>
    %c0_31 = arith.constant 0 : index
    %c0_32 = arith.constant 0 : index
    %118 = vector.load %arg11[%c0_31, %c0_32] : memref<8x18xf32, #tpu.memory_space<vmem>>, vector<8x1xf32>
    tpu.vector_store %arg11[%c0_31, %c0_32], %117 {strides = array<i32>} : memref<8x18xf32, #tpu.memory_space<vmem>>, vector<8x1xf32>,
    %cst_33 = arith.constant 0.000000e+00 : f32
    %119 = vector.broadcast %cst_33 : f32 to vector<8x1xf32>
    %c0_34 = arith.constant 0 : index
    %c17_35 = arith.constant 17 : index
    %120 = vector.load %arg11[%c0_34, %c17_35] : memref<8x18xf32, #tpu.memory_space<vmem>>, vector<8x1xf32>
    tpu.vector_store %arg11[%c0_34, %c17_35], %119 {strides = array<i32>} : memref<8x18xf32, #tpu.memory_space<vmem>>, vector<8x1xf32>,
    %121 = vector.broadcast %113 : vector<4x1xf32> to vector<4x16xf32>
    %122 = arith.mulf %58, %121 : vector<4x16xf32>
    %123 = vector.broadcast %116 : vector<4x1xf32> to vector<4x16xf32>
    %124 = arith.addf %122, %123 : vector<4x16xf32>
    %cst_36 = arith.constant 0.000000e+00 : f32
    %125 = vector.broadcast %cst_36 : f32 to vector<4x16xf32>
    %126 = arith.maximumf %124, %125 : vector<4x16xf32>
    %c0_37 = arith.constant 0 : index
    %c1_38 = arith.constant 1 : index
    %127 = vector.load %arg11[%c0_37, %c1_38] : memref<8x18xf32, #tpu.memory_space<vmem>>, vector<4x16xf32>
    tpu.vector_store %arg11[%c0_37, %c1_38], %126 {strides = array<i32>} : memref<8x18xf32, #tpu.memory_space<vmem>>, vector<4x16xf32>,
    %128 = vector.broadcast %113 : vector<4x1xf32> to vector<4x16xf32>
    %129 = arith.mulf %95, %128 : vector<4x16xf32>
    %130 = vector.broadcast %116 : vector<4x1xf32> to vector<4x16xf32>
    %131 = arith.addf %129, %130 : vector<4x16xf32>
    %cst_39 = arith.constant 0.000000e+00 : f32
    %132 = vector.broadcast %cst_39 : f32 to vector<4x16xf32>
    %133 = arith.maximumf %131, %132 : vector<4x16xf32>
    %c4 = arith.constant 4 : index
    %c1_40 = arith.constant 1 : index
    %134 = vector.load %arg11[%c4, %c1_40] : memref<8x18xf32, #tpu.memory_space<vmem>>, vector<4x16xf32>
    tpu.vector_store %arg11[%c4, %c1_40], %133 {strides = array<i32>} : memref<8x18xf32, #tpu.memory_space<vmem>>, vector<4x16xf32>,
    %c0_41 = arith.constant 0 : index
    %c0_42 = arith.constant 0 : index
    %135 = vector.load %arg11[%c0_41, %c0_42] : memref<8x18xf32, #tpu.memory_space<vmem>>, vector<8x18xf32>
    %c0_43 = arith.constant 0 : index
    %c0_44 = arith.constant 0 : index
    %136 = vector.load %arg5[%c0_43, %c0_44] : memref<8x3xf32, #tpu.memory_space<vmem>>, vector<8x3xf32>
    %cst_45 = arith.constant 0.000000e+00 : f32
    %137 = vector.broadcast %cst_45 : f32 to vector<8x16xf32>
    %138 = vector.extract_strided_slice %135 {offsets = [0, 0], sizes = [8, 16], strides = [1, 1]} : vector<8x18xf32> to vector<8x16xf32>
    %139 = vector.extract_strided_slice %136 {offsets = [0, 0], sizes = [8, 1], strides = [1, 1]} : vector<8x3xf32> to vector<8x1xf32>
    %140 = vector.broadcast %139 : vector<8x1xf32> to vector<8x16xf32>
    %141 = arith.mulf %138, %140 : vector<8x16xf32>
    %142 = arith.addf %137, %141 : vector<8x16xf32>
    %143 = vector.extract_strided_slice %135 {offsets = [0, 1], sizes = [8, 16], strides = [1, 1]} : vector<8x18xf32> to vector<8x16xf32>
    %144 = vector.extract_strided_slice %136 {offsets = [0, 1], sizes = [8, 1], strides = [1, 1]} : vector<8x3xf32> to vector<8x1xf32>
    %145 = vector.broadcast %144 : vector<8x1xf32> to vector<8x16xf32>
    %146 = arith.mulf %143, %145 : vector<8x16xf32>
    %147 = arith.addf %142, %146 : vector<8x16xf32>
    %148 = vector.extract_strided_slice %135 {offsets = [0, 2], sizes = [8, 16], strides = [1, 1]} : vector<8x18xf32> to vector<8x16xf32>
    %149 = vector.extract_strided_slice %136 {offsets = [0, 2], sizes = [8, 1], strides = [1, 1]} : vector<8x3xf32> to vector<8x1xf32>
    %150 = vector.broadcast %149 : vector<8x1xf32> to vector<8x16xf32>
    %151 = arith.mulf %148, %150 : vector<8x16xf32>
    %152 = arith.addf %147, %151 : vector<8x16xf32>
    %c0_46 = arith.constant 0 : index
    %c0_47 = arith.constant 0 : index
    %c0_48 = arith.constant 0 : index
    %153 = vector.load %arg6[%c0_46, %c0_47, %c0_48] : memref<4x8x1xf32, #tpu.memory_space<vmem>>, vector<4x8x1xf32>
    %cst_49 = arith.constant 0.000000e+00 : f32
    %154 = vector.broadcast %cst_49 : f32 to vector<8x1xf32>
    %cst_50 = arith.constant 0.000000e+00 : f32
    %155 = vector.broadcast %cst_50 : f32 to vector<8x1xf32>
    %156 = vector.extract_strided_slice %152 {offsets = [0, 0], sizes = [4, 16], strides = [1, 1]} : vector<8x16xf32> to vector<4x16xf32>
    %cst_51 = arith.constant 0.000000e+00 : f32
    %157 = vector.broadcast %cst_51 : f32 to vector<8x16xf32>
    %158 = vector.extract_strided_slice %156 {offsets = [0, 0], sizes = [1, 16], strides = [1, 1]} : vector<4x16xf32> to vector<1x16xf32>
    %159 = vector.extract_strided_slice %153 {offsets = [0, 0, 0], sizes = [1, 8, 1], strides = [1, 1, 1]} : vector<4x8x1xf32> to vector<1x8x1xf32>
    %160 = vector.shape_cast %159 : vector<1x8x1xf32> to vector<8x1xf32>
    %161 = vector.broadcast %158 : vector<1x16xf32> to vector<8x16xf32>
    %162 = vector.broadcast %160 : vector<8x1xf32> to vector<8x16xf32>
    %163 = arith.mulf %161, %162 : vector<8x16xf32>
    %164 = arith.addf %157, %163 : vector<8x16xf32>
    %165 = vector.extract_strided_slice %156 {offsets = [1, 0], sizes = [1, 16], strides = [1, 1]} : vector<4x16xf32> to vector<1x16xf32>
    %166 = vector.extract_strided_slice %153 {offsets = [1, 0, 0], sizes = [1, 8, 1], strides = [1, 1, 1]} : vector<4x8x1xf32> to vector<1x8x1xf32>
    %167 = vector.shape_cast %166 : vector<1x8x1xf32> to vector<8x1xf32>
    %168 = vector.broadcast %165 : vector<1x16xf32> to vector<8x16xf32>
    %169 = vector.broadcast %167 : vector<8x1xf32> to vector<8x16xf32>
    %170 = arith.mulf %168, %169 : vector<8x16xf32>
    %171 = arith.addf %164, %170 : vector<8x16xf32>
    %172 = vector.extract_strided_slice %156 {offsets = [2, 0], sizes = [1, 16], strides = [1, 1]} : vector<4x16xf32> to vector<1x16xf32>
    %173 = vector.extract_strided_slice %153 {offsets = [2, 0, 0], sizes = [1, 8, 1], strides = [1, 1, 1]} : vector<4x8x1xf32> to vector<1x8x1xf32>
    %174 = vector.shape_cast %173 : vector<1x8x1xf32> to vector<8x1xf32>
    %175 = vector.broadcast %172 : vector<1x16xf32> to vector<8x16xf32>
    %176 = vector.broadcast %174 : vector<8x1xf32> to vector<8x16xf32>
    %177 = arith.mulf %175, %176 : vector<8x16xf32>
    %178 = arith.addf %171, %177 : vector<8x16xf32>
    %179 = vector.extract_strided_slice %156 {offsets = [3, 0], sizes = [1, 16], strides = [1, 1]} : vector<4x16xf32> to vector<1x16xf32>
    %180 = vector.extract_strided_slice %153 {offsets = [3, 0, 0], sizes = [1, 8, 1], strides = [1, 1, 1]} : vector<4x8x1xf32> to vector<1x8x1xf32>
    %181 = vector.shape_cast %180 : vector<1x8x1xf32> to vector<8x1xf32>
    %182 = vector.broadcast %179 : vector<1x16xf32> to vector<8x16xf32>
    %183 = vector.broadcast %181 : vector<8x1xf32> to vector<8x16xf32>
    %184 = arith.mulf %182, %183 : vector<8x16xf32>
    %185 = arith.addf %178, %184 : vector<8x16xf32>
    %cst_52 = arith.constant dense<0.000000e+00> : vector<8xf32>
    %186 = vector.multi_reduction <add>, %185, %cst_52 [1] : vector<8x16xf32> to vector<8xf32>
    %187 = vector.shape_cast %186 : vector<8xf32> to vector<8x1xf32>
    %188 = arith.addf %154, %187 : vector<8x1xf32>
    %189 = arith.mulf %185, %185 : vector<8x16xf32>
    %cst_53 = arith.constant dense<0.000000e+00> : vector<8xf32>
    %190 = vector.multi_reduction <add>, %189, %cst_53 [1] : vector<8x16xf32> to vector<8xf32>
    %191 = vector.shape_cast %190 : vector<8xf32> to vector<8x1xf32>
    %192 = arith.addf %155, %191 : vector<8x1xf32>
    %193 = vector.extract_strided_slice %152 {offsets = [4, 0], sizes = [4, 16], strides = [1, 1]} : vector<8x16xf32> to vector<4x16xf32>
    %cst_54 = arith.constant 0.000000e+00 : f32
    %194 = vector.broadcast %cst_54 : f32 to vector<8x16xf32>
    %195 = vector.extract_strided_slice %193 {offsets = [0, 0], sizes = [1, 16], strides = [1, 1]} : vector<4x16xf32> to vector<1x16xf32>
    %196 = vector.extract_strided_slice %153 {offsets = [0, 0, 0], sizes = [1, 8, 1], strides = [1, 1, 1]} : vector<4x8x1xf32> to vector<1x8x1xf32>
    %197 = vector.shape_cast %196 : vector<1x8x1xf32> to vector<8x1xf32>
    %198 = vector.broadcast %195 : vector<1x16xf32> to vector<8x16xf32>
    %199 = vector.broadcast %197 : vector<8x1xf32> to vector<8x16xf32>
    %200 = arith.mulf %198, %199 : vector<8x16xf32>
    %201 = arith.addf %194, %200 : vector<8x16xf32>
    %202 = vector.extract_strided_slice %193 {offsets = [1, 0], sizes = [1, 16], strides = [1, 1]} : vector<4x16xf32> to vector<1x16xf32>
    %203 = vector.extract_strided_slice %153 {offsets = [1, 0, 0], sizes = [1, 8, 1], strides = [1, 1, 1]} : vector<4x8x1xf32> to vector<1x8x1xf32>
    %204 = vector.shape_cast %203 : vector<1x8x1xf32> to vector<8x1xf32>
    %205 = vector.broadcast %202 : vector<1x16xf32> to vector<8x16xf32>
    %206 = vector.broadcast %204 : vector<8x1xf32> to vector<8x16xf32>
    %207 = arith.mulf %205, %206 : vector<8x16xf32>
    %208 = arith.addf %201, %207 : vector<8x16xf32>
    %209 = vector.extract_strided_slice %193 {offsets = [2, 0], sizes = [1, 16], strides = [1, 1]} : vector<4x16xf32> to vector<1x16xf32>
    %210 = vector.extract_strided_slice %153 {offsets = [2, 0, 0], sizes = [1, 8, 1], strides = [1, 1, 1]} : vector<4x8x1xf32> to vector<1x8x1xf32>
    %211 = vector.shape_cast %210 : vector<1x8x1xf32> to vector<8x1xf32>
    %212 = vector.broadcast %209 : vector<1x16xf32> to vector<8x16xf32>
    %213 = vector.broadcast %211 : vector<8x1xf32> to vector<8x16xf32>
    %214 = arith.mulf %212, %213 : vector<8x16xf32>
    %215 = arith.addf %208, %214 : vector<8x16xf32>
    %216 = vector.extract_strided_slice %193 {offsets = [3, 0], sizes = [1, 16], strides = [1, 1]} : vector<4x16xf32> to vector<1x16xf32>
    %217 = vector.extract_strided_slice %153 {offsets = [3, 0, 0], sizes = [1, 8, 1], strides = [1, 1, 1]} : vector<4x8x1xf32> to vector<1x8x1xf32>
    %218 = vector.shape_cast %217 : vector<1x8x1xf32> to vector<8x1xf32>
    %219 = vector.broadcast %216 : vector<1x16xf32> to vector<8x16xf32>
    %220 = vector.broadcast %218 : vector<8x1xf32> to vector<8x16xf32>
    %221 = arith.mulf %219, %220 : vector<8x16xf32>
    %222 = arith.addf %215, %221 : vector<8x16xf32>
    %cst_55 = arith.constant dense<0.000000e+00> : vector<8xf32>
    %223 = vector.multi_reduction <add>, %222, %cst_55 [1] : vector<8x16xf32> to vector<8xf32>
    %224 = vector.shape_cast %223 : vector<8xf32> to vector<8x1xf32>
    %225 = arith.addf %188, %224 : vector<8x1xf32>
    %226 = arith.mulf %222, %222 : vector<8x16xf32>
    %cst_56 = arith.constant dense<0.000000e+00> : vector<8xf32>
    %227 = vector.multi_reduction <add>, %226, %cst_56 [1] : vector<8x16xf32> to vector<8xf32>
    %228 = vector.shape_cast %227 : vector<8xf32> to vector<8x1xf32>
    %229 = arith.addf %192, %228 : vector<8x1xf32>
    %cst_57 = arith.constant 3.125000e-02 : f32
    %230 = vector.broadcast %cst_57 : f32 to vector<8x1xf32>
    %231 = arith.mulf %225, %230 : vector<8x1xf32>
    %cst_58 = arith.constant 3.125000e-02 : f32
    %232 = vector.broadcast %cst_58 : f32 to vector<8x1xf32>
    %233 = arith.mulf %229, %232 : vector<8x1xf32>
    %234 = arith.mulf %231, %231 : vector<8x1xf32>
    %235 = arith.subf %233, %234 : vector<8x1xf32>
    %cst_59 = arith.constant 9.99999974E-6 : f32
    %236 = vector.broadcast %cst_59 : f32 to vector<8x1xf32>
    %237 = arith.addf %235, %236 : vector<8x1xf32>
    %238 = math.rsqrt %237 : vector<8x1xf32>
    %c0_60 = arith.constant 0 : index
    %c0_61 = arith.constant 0 : index
    %239 = vector.load %arg7[%c0_60, %c0_61] : memref<8x1xf32, #tpu.memory_space<vmem>>, vector<8x1xf32>
    %240 = arith.mulf %238, %239 : vector<8x1xf32>
    %c0_62 = arith.constant 0 : index
    %c0_63 = arith.constant 0 : index
    %241 = vector.load %arg8[%c0_62, %c0_63] : memref<8x1xf32, #tpu.memory_space<vmem>>, vector<8x1xf32>
    %242 = arith.mulf %231, %240 : vector<8x1xf32>
    %243 = arith.subf %241, %242 : vector<8x1xf32>
    %244 = vector.broadcast %240 : vector<8x1xf32> to vector<8x16xf32>
    %245 = arith.mulf %185, %244 : vector<8x16xf32>
    %246 = vector.broadcast %243 : vector<8x1xf32> to vector<8x16xf32>
    %247 = arith.addf %245, %246 : vector<8x16xf32>
    %c0_64 = arith.constant 0 : index
    %c0_65 = arith.constant 0 : index
    %248 = vector.load %arg9[%c0_64, %c0_65] : memref<16x16xf32, #tpu.memory_space<vmem>>, vector<8x16xf32>
    tpu.vector_store %arg9[%c0_64, %c0_65], %247 {strides = array<i32>} : memref<16x16xf32, #tpu.memory_space<vmem>>, vector<8x16xf32>,
    %249 = vector.broadcast %240 : vector<8x1xf32> to vector<8x16xf32>
    %250 = arith.mulf %222, %249 : vector<8x16xf32>
    %251 = vector.broadcast %243 : vector<8x1xf32> to vector<8x16xf32>
    %252 = arith.addf %250, %251 : vector<8x16xf32>
    %c8 = arith.constant 8 : index
    %c0_66 = arith.constant 0 : index
    %253 = vector.load %arg9[%c8, %c0_66] : memref<16x16xf32, #tpu.memory_space<vmem>>, vector<8x16xf32>
    tpu.vector_store %arg9[%c8, %c0_66], %252 {strides = array<i32>} : memref<16x16xf32, #tpu.memory_space<vmem>>, vector<8x16xf32>,
    return
  }
}

</mosaic_0001>

<llo_original>
// kernel: sepconv_pallas.1
$region0: #{sepconv_pallas.1}
  #allocation0 [shape = 'u32[]', space=smem, size = 0x4, offset = 0x4, fixed_abs, tag = 'smem constant byte address 0x4 - core index']
  #allocation1 [shape = 'u32[144,128]{1,0:T(1,128)}', space=vmem, size = 0x12000, scoped, tag = 'internal scratch']
  #allocation2 [shape = 'f32[8,18]{1,0:T(8,128)}', space=vmem, size = 0x1000, scoped, tag = 'scratch operand']
  #allocation3 [shape = 'f32[8,18]{1,0:T(8,128)}', space=vmem, size = 0x1000, scoped, tag = 'scratch operand']
  %s0 = inlined_call_operand.vmem [shape: f32[8,16], index: 0, kind: input, shape index: {}]
  %s1 = inlined_call_operand.vmem [shape: f32[8,3], index: 1, kind: input, shape index: {}]
  %s2 = inlined_call_operand.vmem [shape: f32[4,4,1], index: 2, kind: input, shape index: {}]
  %s3 = inlined_call_operand.vmem [shape: f32[4,1], index: 3, kind: input, shape index: {}]
  %s4 = inlined_call_operand.vmem [shape: f32[4,1], index: 4, kind: input, shape index: {}]
  %s5 = inlined_call_operand.vmem [shape: f32[8,3], index: 5, kind: input, shape index: {}]
  %s6 = inlined_call_operand.vmem [shape: f32[4,8,1], index: 6, kind: input, shape index: {}]
  %s7 = inlined_call_operand.vmem [shape: f32[8,1], index: 7, kind: input, shape index: {}]
  %s8 = inlined_call_operand.vmem [shape: f32[8,1], index: 8, kind: input, shape index: {}]
  %s9 = inlined_call_operand.hbm [shape: f32[16,16], index: 9, kind: output, shape index: {}]
  %s10 = sld [smem:[#allocation0]]
  $region46: #{sepconv_pallas.1} parent=0
    _
  %s12 = ssub.s32 1, %s10
  %s13 = scalar_select 0, %s12, %s10
  $region1: #{sepconv_pallas.1} parent=0
    #allocation4 [shape = 'u8[8192]{0}', space=vmem, size = 0x2000, scoped, tag = 'output window, operand 0, single buffered']
    #allocation5 [shape = 's32[1]{0}', space=sflag, size = 0x4, scoped, tag = 'scoped memory for sepconv_pallas.1']
    %14 = vsyncpa [#allocation5], 0
    // Predicated region
    $region2: #{sepconv_pallas.1} parent=1 // pred_check
      _
    $region3: #{sepconv_pallas.1} parent=1 // pred_check_branch
      %16 = sbr.rel (0) target = $region5
    $region4: #{sepconv_pallas.1} parent=1 // pred_region
      _
    $region5: #{sepconv_pallas.1} parent=1 // pred_fallthru
      _
    // Predicated region
    $region6: #{sepconv_pallas.1} parent=1 // pred_check
      _
    $region7: #{sepconv_pallas.1} parent=1 // pred_check_branch
      %18 = sbr.rel (0) target = $region9
    $region8: #{sepconv_pallas.1} parent=1 // pred_region
      _
    $region9: #{sepconv_pallas.1} parent=1 // pred_fallthru
      _
    // Predicated region
    $region10: #{sepconv_pallas.1} parent=1 // pred_check
      _
    $region11: #{sepconv_pallas.1} parent=1 // pred_check_branch
      %20 = sbr.rel (0) target = $region13
    $region12: #{sepconv_pallas.1} parent=1 // pred_region
      _
    $region13: #{sepconv_pallas.1} parent=1 // pred_fallthru
      _
    // Predicated region
    $region14: #{sepconv_pallas.1} parent=1 // pred_check
      _
    $region15: #{sepconv_pallas.1} parent=1 // pred_check_branch
      %22 = sbr.rel (0) target = $region17
    $region16: #{sepconv_pallas.1} parent=1 // pred_region
      _
    $region17: #{sepconv_pallas.1} parent=1 // pred_fallthru
      _
    // Predicated region
    $region18: #{sepconv_pallas.1} parent=1 // pred_check
      _
    $region19: #{sepconv_pallas.1} parent=1 // pred_check_branch
      %24 = sbr.rel (0) target = $region21
    $region20: #{sepconv_pallas.1} parent=1 // pred_region
      _
    $region21: #{sepconv_pallas.1} parent=1 // pred_fallthru
      _
    // Predicated region
    $region22: #{sepconv_pallas.1} parent=1 // pred_check
      _
    $region23: #{sepconv_pallas.1} parent=1 // pred_check_branch
      %26 = sbr.rel (0) target = $region25
    $region24: #{sepconv_pallas.1} parent=1 // pred_region
      _
    $region25: #{sepconv_pallas.1} parent=1 // pred_fallthru
      _
    // Predicated region
    $region26: #{sepconv_pallas.1} parent=1 // pred_check
      _
    $region27: #{sepconv_pallas.1} parent=1 // pred_check_branch
      %28 = sbr.rel (0) target = $region29
    $region28: #{sepconv_pallas.1} parent=1 // pred_region
      _
    $region29: #{sepconv_pallas.1} parent=1 // pred_fallthru
      _
    // Predicated region
    $region30: #{sepconv_pallas.1} parent=1 // pred_check
      _
    $region31: #{sepconv_pallas.1} parent=1 // pred_check_branch
      %30 = sbr.rel (0) target = $region33
    $region32: #{sepconv_pallas.1} parent=1 // pred_region
      _
    $region33: #{sepconv_pallas.1} parent=1 // pred_fallthru
      _
    // Predicated region
    $region34: #{sepconv_pallas.1} parent=1 // pred_check
      _
    $region35: #{sepconv_pallas.1} parent=1 // pred_check_branch
      %32 = sbr.rel (0) target = $region37
    $region36: #{sepconv_pallas.1} parent=1 // pred_region
      _
    $region37: #{sepconv_pallas.1} parent=1 // pred_fallthru
      _
    %vm33 = vcmask 7168
    %34 = vst.msk [vmem:[#allocation2] sm:$0xff] %vm33, 0.0
    %vm35 = vcmask 146568
    %36 = vst.msk [vmem:[#allocation2] sm:$0xff] %vm35, 0.0
    %v37 = vld [vmem:[%s0] sm:$0xff]
    %v38 = vmax.f32 %v37, 0.0
    %40 = vrot.lane.b32.xlu0 %v38, 1
    %v41 = vpop.permute.xlu0 %40
    %vm43 = vcmask 138248
    %44 = vst.msk [vmem:[#allocation2] sm:$0xff] %vm43, %v41
    %v45 = vld [vmem:[#allocation2] sm:$0xff]
    %v46 = vld [vmem:[%s1] sm:$0xff]
    %48 = vset.pattern.permute.xlu0 0
    %49 = vperm.xlu0 %48, %v46
    %v50 = vpop.permute.xlu0 %49
    %v52 = vmul.f32 %v45, %v50
    %v53 = vadd.f32 %v52, 0.0
    %54 = vset.pattern.permute.xlu0 1
    %55 = vperm.xlu0 %54, %v46
    %v56 = vpop.permute.xlu0 %55
    %v58 = vmul.f32 %v45, %v56
    %60 = vrot.lane.b32.xlu0 %v58, 127
    %v61 = vpop.permute.xlu0 %60
    %v63 = vadd.f32 %v53, %v61
    %64 = vset.pattern.permute.xlu0 2
    %65 = vperm.xlu0 %64, %v46
    %v66 = vpop.permute.xlu0 %65
    %v68 = vmul.f32 %v45, %v66
    %70 = vrot.lane.b32.xlu0 %v68, 126
    %v71 = vpop.permute.xlu0 %70
    %v73 = vadd.f32 %v63, %v71
    %v74 = vld [vmem:[%s2] sm:$0xf]
    %v75 = vld [vmem:[%s2 + $0x4] sm:$0xf]
    %v76 = vld [vmem:[%s2 + $0x8] sm:$0xf]
    %v77 = vld [vmem:[%s2 + $0xc] sm:$0xf]
    %v78 = vlaneseq
    %v79 = vshrl.u32 %v78, 7
    %v80 = vsub.s32 0, %v79
    %v81 = vrot.slane %v73, %v80
    %83 = vset.pattern.permute.xlu0 0
    %84 = vperm.xlu0 %83, %v74
    %v85 = vpop.permute.xlu0 %84
    %v87 = vmul.f32 %v81, %v85
    %v88 = vadd.f32 %v87, 0.0
    %v89 = vlaneseq
    %v90 = vshrl.u32 %v89, 7
    %v91 = vsub.s32 1, %v90
    %v92 = vrot.slane %v73, %v91
    %94 = vset.pattern.permute.xlu0 0
    %95 = vperm.xlu0 %94, %v75
    %v96 = vpop.permute.xlu0 %95
    %v98 = vmul.f32 %v92, %v96
    %v99 = vadd.f32 %v88, %v98
    %v100 = vlaneseq
    %v101 = vshrl.u32 %v100, 7
    %v102 = vsub.s32 2, %v101
    %v103 = vrot.slane %v73, %v102
    %105 = vset.pattern.permute.xlu0 0
    %106 = vperm.xlu0 %105, %v76
    %v107 = vpop.permute.xlu0 %106
    %v109 = vmul.f32 %v103, %v107
    %v110 = vadd.f32 %v99, %v109
    %v111 = vlaneseq
    %v112 = vshrl.u32 %v111, 7
    %v113 = vsub.s32 3, %v112
    %v114 = vrot.slane %v73, %v113
    %116 = vset.pattern.permute.xlu0 0
    %117 = vperm.xlu0 %116, %v77
    %v118 = vpop.permute.xlu0 %117
    %v120 = vmul.f32 %v114, %v118
    %v121 = vadd.f32 %v110, %v120
    %vm122 = vcmask 125952
    %v123 = vsel %vm122, %v121, 0.0
    %124 = vadd.xlane.f32.xlu0 %v123
    %v125 = vpop.xlane.xlu0 %124
    %v126 = vadd.f32 %v125, 0.0
    %v127 = vmul.f32 %v121, %v121
    %v128 = vsel %vm122, %v127, 0.0
    %129 = vadd.xlane.f32.xlu0 %v128
    %v130 = vpop.xlane.xlu0 %129
    %v131 = vadd.f32 %v130, 0.0
    %v132 = vlaneseq
    %v133 = vshrl.u32 %v132, 7
    %v134 = vsub.s32 4, %v133
    %v135 = vrot.slane %v73, %v134
    %v136 = vmul.f32 %v135, %v85
    %v137 = vadd.f32 %v136, 0.0
    %v138 = vlaneseq
    %v139 = vshrl.u32 %v138, 7
    %v140 = vsub.s32 5, %v139
    %v141 = vrot.slane %v73, %v140
    %v142 = vmul.f32 %v141, %v96
    %v143 = vadd.f32 %v137, %v142
    %v144 = vlaneseq
    %v145 = vshrl.u32 %v144, 7
    %v146 = vsub.s32 6, %v145
    %v147 = vrot.slane %v73, %v146
    %v148 = vmul.f32 %v147, %v107
    %v149 = vadd.f32 %v143, %v148
    %v150 = vlaneseq
    %v151 = vshrl.u32 %v150, 7
    %v152 = vsub.s32 7, %v151
    %v153 = vrot.slane %v73, %v152
    %v154 = vmul.f32 %v153, %v118
    %v155 = vadd.f32 %v149, %v154
    %v156 = vsel %vm122, %v155, 0.0
    %157 = vadd.xlane.f32.xlu0 %v156
    %v158 = vpop.xlane.xlu0 %157
    %v159 = vadd.f32 %v126, %v158
    %v160 = vmul.f32 %v155, %v155
    %v161 = vsel %vm122, %v160, 0.0
    %162 = vadd.xlane.f32.xlu0 %v161
    %v163 = vpop.xlane.xlu0 %162
    %v164 = vadd.f32 %v131, %v163
    %v165 = vmul.f32 %v159, 0.03125
    %v166 = vmul.f32 %v164, 0.03125
    %v167 = vmul.f32 %v165, %v165
    %v168 = vsub.f32 %v166, %v167
    %v169 = vadd.f32 %v168, 1e-05
    %v170 = vrsqrt.pop %v169
    %v171 = vld [vmem:[%s3] sm:$0xf]
    %v172 = vmul.f32 %v170, %v171
    %v173 = vld [vmem:[%s4] sm:$0xf]
    %v174 = vmul.f32 %v165, %v172
    %v175 = vsub.f32 %v173, %v174
    %176 = vst.msk [vmem:[#allocation3] sm:$0xff] %vm33, 0.0
    %177 = vst.msk [vmem:[#allocation3] sm:$0xff] %vm35, 0.0
    %179 = vset.pattern.permute.xlu0 0
    %180 = vperm.xlu0 %179, %v172
    %v181 = vpop.permute.xlu0 %180
    %v183 = vmul.f32 %v121, %v181
    %185 = vset.pattern.permute.xlu0 0
    %186 = vperm.xlu0 %185, %v175
    %v187 = vpop.permute.xlu0 %186
    %v189 = vadd.f32 %v183, %v187
    %v190 = vmax.f32 %v189, 0.0
    %192 = vrot.lane.b32.xlu0 %v190, 1
    %v193 = vpop.permute.xlu0 %192
    %vm195 = vcmask 134152
    %196 = vst.msk [vmem:[#allocation3] sm:$0xf] %vm195, %v193
    %v197 = vmul.f32 %v155, %v181
    %v198 = vadd.f32 %v197, %v187
    %v199 = vmax.f32 %v198, 0.0
    %201 = vrot.lane.b32.xlu0 %v199, 1
    %v202 = vpop.permute.xlu0 %201
    %204 = vst.msk [vmem:[#allocation3 + $0x4] sm:$0xf] %vm195, %v202
    %v205 = vld [vmem:[#allocation3] sm:$0xff]
    %v206 = vld [vmem:[%s5] sm:$0xff]
    %208 = vset.pattern.permute.xlu0 0
    %209 = vperm.xlu0 %208, %v206
    %v210 = vpop.permute.xlu0 %209
    %v212 = vmul.f32 %v205, %v210
    %v213 = vadd.f32 %v212, 0.0
    %214 = vset.pattern.permute.xlu0 1
    %215 = vperm.xlu0 %214, %v206
    %v216 = vpop.permute.xlu0 %215
    %v218 = vmul.f32 %v205, %v216
    %220 = vrot.lane.b32.xlu0 %v218, 127
    %v221 = vpop.permute.xlu0 %220
    %v223 = vadd.f32 %v213, %v221
    %224 = vset.pattern.permute.xlu0 2
    %225 = vperm.xlu0 %224, %v206
    %v226 = vpop.permute.xlu0 %225
    %v228 = vmul.f32 %v205, %v226
    %230 = vrot.lane.b32.xlu0 %v228, 126
    %v231 = vpop.permute.xlu0 %230
    %v233 = vadd.f32 %v223, %v231
    %v234 = vld [vmem:[%s6] sm:$0xff]
    %v235 = vld [vmem:[%s6 + $0x8] sm:$0xff]
    %v236 = vld [vmem:[%s6 + $0x10] sm:$0xff]
    %v237 = vld [vmem:[%s6 + $0x18] sm:$0xff]
    %v238 = vlaneseq
    %v239 = vshrl.u32 %v238, 7
    %v240 = vsub.s32 0, %v239
    %v241 = vrot.slane %v233, %v240
    %243 = vset.pattern.permute.xlu0 0
    %244 = vperm.xlu0 %243, %v234
    %v245 = vpop.permute.xlu0 %244
    %v247 = vmul.f32 %v241, %v245
    %v248 = vadd.f32 %v247, 0.0
    %v249 = vlaneseq
    %v250 = vshrl.u32 %v249, 7
    %v251 = vsub.s32 1, %v250
    %v252 = vrot.slane %v233, %v251
    %254 = vset.pattern.permute.xlu0 0
    %255 = vperm.xlu0 %254, %v235
    %v256 = vpop.permute.xlu0 %255
    %v258 = vmul.f32 %v252, %v256
    %v259 = vadd.f32 %v248, %v258
    %v260 = vlaneseq
    %v261 = vshrl.u32 %v260, 7
    %v262 = vsub.s32 2, %v261
    %v263 = vrot.slane %v233, %v262
    %265 = vset.pattern.permute.xlu0 0
    %266 = vperm.xlu0 %265, %v236
    %v267 = vpop.permute.xlu0 %266
    %v269 = vmul.f32 %v263, %v267
    %v270 = vadd.f32 %v259, %v269
    %v271 = vlaneseq
    %v272 = vshrl.u32 %v271, 7
    %v273 = vsub.s32 3, %v272
    %v274 = vrot.slane %v233, %v273
    %276 = vset.pattern.permute.xlu0 0
    %277 = vperm.xlu0 %276, %v237
    %v278 = vpop.permute.xlu0 %277
    %v280 = vmul.f32 %v274, %v278
    %v281 = vadd.f32 %v270, %v280
    %vm282 = vcmask 130048
    %v283 = vsel %vm282, %v281, 0.0
    %284 = vadd.xlane.f32.xlu0 %v283
    %v285 = vpop.xlane.xlu0 %284
    %v286 = vadd.f32 %v285, 0.0
    %v287 = vmul.f32 %v281, %v281
    %v288 = vsel %vm282, %v287, 0.0
    %289 = vadd.xlane.f32.xlu0 %v288
    %v290 = vpop.xlane.xlu0 %289
    %v291 = vadd.f32 %v290, 0.0
    %v292 = vlaneseq
    %v293 = vshrl.u32 %v292, 7
    %v294 = vsub.s32 4, %v293
    %v295 = vrot.slane %v233, %v294
    %v296 = vmul.f32 %v295, %v245
    %v297 = vadd.f32 %v296, 0.0
    %v298 = vlaneseq
    %v299 = vshrl.u32 %v298, 7
    %v300 = vsub.s32 5, %v299
    %v301 = vrot.slane %v233, %v300
    %v302 = vmul.f32 %v301, %v256
    %v303 = vadd.f32 %v297, %v302
    %v304 = vlaneseq
    %v305 = vshrl.u32 %v304, 7
    %v306 = vsub.s32 6, %v305
    %v307 = vrot.slane %v233, %v306
    %v308 = vmul.f32 %v307, %v267
    %v309 = vadd.f32 %v303, %v308
    %v310 = vlaneseq
    %v311 = vshrl.u32 %v310, 7
    %v312 = vsub.s32 7, %v311
    %v313 = vrot.slane %v233, %v312
    %v314 = vmul.f32 %v313, %v278
    %v315 = vadd.f32 %v309, %v314
    %v316 = vsel %vm282, %v315, 0.0
    %317 = vadd.xlane.f32.xlu0 %v316
    %v318 = vpop.xlane.xlu0 %317
    %v319 = vadd.f32 %v286, %v318
    %v320 = vmul.f32 %v315, %v315
    %v321 = vsel %vm282, %v320, 0.0
    %322 = vadd.xlane.f32.xlu0 %v321
    %v323 = vpop.xlane.xlu0 %322
    %v324 = vadd.f32 %v291, %v323
    %v325 = vmul.f32 %v319, 0.03125
    %v326 = vmul.f32 %v324, 0.03125
    %v327 = vmul.f32 %v325, %v325
    %v328 = vsub.f32 %v326, %v327
    %v329 = vadd.f32 %v328, 1e-05
    %v330 = vrsqrt.pop %v329
    %v331 = vld [vmem:[%s7] sm:$0xff]
    %v332 = vmul.f32 %v330, %v331
    %v333 = vld [vmem:[%s8] sm:$0xff]
    %v334 = vmul.f32 %v325, %v332
    %v335 = vsub.f32 %v333, %v334
    %337 = vset.pattern.permute.xlu0 0
    %338 = vperm.xlu0 %337, %v332
    %v339 = vpop.permute.xlu0 %338
    %v341 = vmul.f32 %v281, %v339
    %343 = vset.pattern.permute.xlu0 0
    %344 = vperm.xlu0 %343, %v335
    %v345 = vpop.permute.xlu0 %344
    %v347 = vadd.f32 %v341, %v345
    %348 = vst.msk [vmem:[#allocation4] sm:$0xff] %vm282, %v347
    %v349 = vmul.f32 %v315, %v339
    %v350 = vadd.f32 %v349, %v345
    %351 = vst.msk [vmem:[#allocation4 + $0x8] sm:$0xff] %vm282, %v350
    // Predicated region
    $region38: #{sepconv_pallas.1} parent=1 // pred_check
      _
    $region39: #{sepconv_pallas.1} parent=1 // pred_check_branch
      %353 = sbr.rel (0) target = $region41
    $region40: #{sepconv_pallas.1} parent=1 // pred_region
      %s355 = ssub.s32 256, 256
      %356 = vsyncadd [#allocation5], %s355
      %s357 = sshll.u32 [#allocation4], 4
      %s358 = int_to_ptr.vmem [resolvable:$true] %s357
      %363 = dma.vmem_to_hbm [thread:$0]  %s358, 256, %s9, [#allocation5], 128, 128, 8
    $region41: #{sepconv_pallas.1} parent=1 // pred_fallthru
      _
    // Predicated region
    $region42: #{sepconv_pallas.1} parent=1 // pred_check
      _
    $region43: #{sepconv_pallas.1} parent=1 // pred_check_branch
      %365 = sbr.rel (0) target = $region45
    $region44: #{sepconv_pallas.1} parent=1 // pred_region
      %366 = dma.done [#allocation5], 256
    $region45: #{sepconv_pallas.1} parent=1 // pred_fallthru
      _
    %367 = vsyncpa [#allocation5], 1

</llo_original>
